<compile_context>
chip_gen: v5e
topology: v5e:2x2
jax: 0.10.0
libtpu: 0.0.40
codegen_flags: <defaults>
</compile_context>

<pallas_src>
import functools

import jax
import jax.numpy as jnp
import numpy as np
from jax.experimental import pallas as pl
from jax.experimental.pallas import tpu as pltpu

NUM_MIXTURES = 3                      # num_mixtures=3 in the module
NUM_BLOCKS = 2 * NUM_MIXTURES + 1     # 4 gate blocks + 3 expert blocks = 7


def _round_up(x, m):
    return ((x + m - 1) // m) * m


def _pick_col_tile(c_pad, weight_budget_bytes=16 * 1024 * 1024):
    """Largest output-column tile (multiple of 128 dividing c_pad) whose
    double-buffered bf16 weight tile (2 * c_pad * 7 * tc * 2 bytes) fits."""
    best = 128
    tc = 128
    while tc <= c_pad:
        if c_pad % tc == 0 and 4 * NUM_BLOCKS * c_pad * tc <= weight_budget_bytes:
            best = tc
        tc += 128
    return best


def _vmem_limit_bytes():
    """Per-core VMEM capacity minus headroom for compiler scratch/spills."""
    default = 48 * 1024 * 1024        # safe on v5e / v6e / v7x
    try:
        cap = int(pltpu.get_tpu_info().vmem_capacity_bytes)
        return max(default, cap - 16 * 1024 * 1024)   # 112 MiB on v5e/v6e, 48 on v7x
    except Exception:
        return default


def moe_softmax_kernel(x_ref, w_ref, b_ref, o_ref, acc_ref, sum_ref, *,
                       n_col, tc, c_valid):
    """Fused MoE head + channel softmax; column-tiled, two-pass.

    Grid = (row_tiles, 2*n_col).
      Pass 1 (j <  n_col): per-block MXU dots on weight column tile j, gate
        softmax + sigmoid-expert mixture, exp(prob) stored to acc_ref[j],
        running row sums accumulated in sum_ref.
      Pass 2 (j >= n_col): normalize acc_ref[j-n_col] by the total row sum and
        emit output column tile j-n_col (weight/x block indices are pinned, so
        these steps issue no new HBM traffic).

    x_ref: [TN, C_pad]        bf16 input rows
    w_ref: [C_pad, 7*TC]      bf16 fused weights for column tile j (4 gates | 3 experts)
    b_ref: [1, 7*TC]          f32 fused biases for column tile j
    o_ref: [TN, TC]           f32 output column tile
    acc_ref: [n_col, TN, TC]  f32 scratch: exp(prob) per column tile
    sum_ref: [TN, 1]          f32 scratch: running channel sums
    """
    j = pl.program_id(1)

    @pl.when(j == 0)
    def _():
        sum_ref[...] = jnp.zeros_like(sum_ref)

    @pl.when(j < n_col)
    def _compute():
        x = x_ref[...]                                           # [TN, C_pad] bf16

        # ---- 4 gate logit tiles: per-block dots keep f32 intermediates small.
        gate = []
        for m in range(NUM_MIXTURES + 1):
            g = jnp.dot(x, w_ref[:, m * tc:(m + 1) * tc],
                        preferred_element_type=jnp.float32)
            gate.append(g + b_ref[:, m * tc:(m + 1) * tc])

        # ---- gating distribution: softmax over the (M+1) gate logits.
        g_max = jnp.maximum(jnp.maximum(gate[0], gate[1]),
                            jnp.maximum(gate[2], gate[3]))
        g_exp = [jnp.exp(g - g_max) for g in gate]
        inv_denom = pl.reciprocal(
            g_exp[0] + g_exp[1] + g_exp[2] + g_exp[3], approx=True)

        # ---- mixture of sigmoid experts (first M gates only), one at a time.
        prob = jnp.zeros_like(g_max)
        for m in range(NUM_MIXTURES):
            c0 = (NUM_MIXTURES + 1 + m) * tc
            e = jnp.dot(x, w_ref[:, c0:c0 + tc],
                        preferred_element_type=jnp.float32) + b_ref[:, c0:c0 + tc]
            prob = prob + (g_exp[m] * inv_denom) * jax.nn.sigmoid(e)

        # ---- exp for the final nn.Softmax(dim=1): prob is in [0, 1], so exp
        # cannot overflow -> skip the max subtraction.  Mask padded lanes only
        # when C is not 128-aligned.
        p_exp = jnp.exp(prob)
        if c_valid < n_col * tc:
            col = j * tc + jax.lax.broadcasted_iota(jnp.int32, p_exp.shape, 1)
            p_exp = jnp.where(col < c_valid, p_exp, 0.0)

        acc_ref[j] = p_exp
        sum_ref[...] += jnp.sum(p_exp, axis=-1, keepdims=True)

    @pl.when(j >= n_col)
    def _normalize():
        # Exact reciprocal here so output rows sum to 1 within f32 rounding.
        o_ref[...] = acc_ref[j - n_col] * (1.0 / sum_ref[...])


def init_params(key, c):
    """Deterministic nn.Linear-style init for gates and experts (f32 masters)."""
    kg_w, kg_b, ke_w, ke_b = jax.random.split(key, 4)
    bound = 1.0 / np.sqrt(c)
    wg = jax.random.uniform(kg_w, (NUM_MIXTURES + 1, c, c), jnp.float32, -bound, bound)
    bg = jax.random.uniform(kg_b, (NUM_MIXTURES + 1, 1, c), jnp.float32, -bound, bound)
    we = jax.random.uniform(ke_w, (NUM_MIXTURES, c, c), jnp.float32, -bound, bound)
    be = jax.random.uniform(ke_b, (NUM_MIXTURES, 1, c), jnp.float32, -bound, bound)
    return wg, bg, we, be


def pack_params(params, c):
    """One-time packing of the fused weight slab (call at init, NOT per forward).

    Layout: output column tile j is the contiguous slice
    w_all[:, j*7*tc:(j+1)*7*tc] = [gate0|gate1|gate2|gate3|exp0|exp1|exp2]
    columns j*tc..(j+1)*tc, so the kernel's weight BlockSpec DMA is one dense
    [C_pad, 7*tc] tile per column step.
    """
    wg, bg, we, be = params
    c_pad = _round_up(c, 128)
    tc = _pick_col_tile(c_pad)
    n_col = c_pad // tc

    w_blocks = [wg[m] for m in range(NUM_MIXTURES + 1)] + \
               [we[m] for m in range(NUM_MIXTURES)]
    b_blocks = [bg[m] for m in range(NUM_MIXTURES + 1)] + \
               [be[m] for m in range(NUM_MIXTURES)]
    w_pad = jnp.stack([jnp.pad(w, ((0, c_pad - c), (0, c_pad - c))) for w in w_blocks])
    b_pad = jnp.stack([jnp.pad(b, ((0, 0), (0, c_pad - c))) for b in b_blocks])

    w_all = (w_pad.reshape(NUM_BLOCKS, c_pad, n_col, tc)
             .transpose(1, 2, 0, 3)
             .reshape(c_pad, n_col * NUM_BLOCKS * tc)
             .astype(jnp.bfloat16))
    b_all = (b_pad.reshape(NUM_BLOCKS, 1, n_col, tc)
             .transpose(1, 2, 0, 3)
             .reshape(1, n_col * NUM_BLOCKS * tc)
             .astype(jnp.float32))
    w_all = jax.block_until_ready(w_all)     # materialize once, reuse every call
    b_all = jax.block_until_ready(b_all)
    return {"w_all": w_all, "b_all": b_all, "c": c, "c_pad": c_pad,
            "tc": tc, "n_col": n_col}


def three_stream_forward(V_S, V_T, V_A, packed):
    """softmax(MoE(stack([V_S, V_T, V_A], dim=1))) -> [B*3, C]."""
    w_all, b_all = packed["w_all"], packed["b_all"]
    C, c_pad = packed["c"], packed["c_pad"]
    tc, n_col = packed["tc"], packed["n_col"]
    B = V_S.shape[0]
    N = 3 * B

    # torch.stack(..., dim=1) -> [B, 3, C]; MoE's .view(-1, vocab) flattens to
    # [B*3, C] (row n = b*3 + stream).
    x = jnp.stack([V_S, V_T, V_A], axis=1).reshape(N, C).astype(jnp.float32)

    # Row tile: 256 fills the v6e/v7x MXU M-dimension; multiple of 16 so bf16
    # rows pack whole sublane groups.
    tn = min(256, _round_up(N, 16))
    n_pad = _round_up(N, tn)
    n_row = n_pad // tn
    x_pad = jnp.pad(x, ((0, n_pad - N), (0, c_pad - C))).astype(jnp.bfloat16)

    # With <= 2 row tiles the kernel is weight-DMA bound; keep the row axis on
    # one core instead of doubling weight HBM traffic across v7x's two cores.
    row_sem = "parallel" if n_row > 2 else "arbitrary"

    cost = pl.CostEstimate(
        flops=2 * n_pad * c_pad * NUM_BLOCKS * c_pad,
        transcendentals=9 * n_pad * c_pad,
        bytes_accessed=(
            2 * NUM_BLOCKS * c_pad * c_pad * n_row     # bf16 weights streamed per row tile
            + 4 * NUM_BLOCKS * c_pad * n_row           # f32 biases
            + 2 * n_pad * c_pad                        # bf16 x
            + 4 * n_pad * c_pad                        # f32 out
        ),
    )

    kernel = functools.partial(moe_softmax_kernel, n_col=n_col, tc=tc, c_valid=C)

    out = pl.pallas_call(
        kernel,
        out_shape=jax.ShapeDtypeStruct((n_pad, c_pad), jnp.float32),
        grid=(n_row, 2 * n_col),
        in_specs=[
            # x: full row tile, constant across the column axis (fetched once per row tile).
            pl.BlockSpec((tn, c_pad), lambda i, j: (i, 0)),
            # weights: slide over column tiles in pass 1, pinned in pass 2 (no re-fetch).
            pl.BlockSpec((c_pad, NUM_BLOCKS * tc),
                         lambda i, j: (0, jnp.minimum(j, n_col - 1))),
            pl.BlockSpec((1, NUM_BLOCKS * tc),
                         lambda i, j: (0, jnp.minimum(j, n_col - 1))),
        ],
        out_specs=pl.BlockSpec((tn, tc),
                               lambda i, j: (i, jnp.maximum(j - n_col, 0))),
        scratch_shapes=[
            pltpu.VMEM((n_col, tn, tc), jnp.float32),   # exp(prob) per column tile
            pltpu.VMEM((tn, 1), jnp.float32),           # running channel sums
        ],
        compiler_params=pltpu.CompilerParams(
            dimension_semantics=(row_sem, "arbitrary"),
            vmem_limit_bytes=_vmem_limit_bytes(),
        ),
        cost_estimate=cost,
    )(x_pad, w_all, b_all)

    return out[:N, :C]


def reference_forward(V_S, V_T, V_A, params):
    """Pure-JAX reference of the same math (bf16-rounded weights/x like kernel)."""
    wg, bg, we, be = params
    wg = wg.astype(jnp.bfloat16).astype(jnp.float32)
    we = we.astype(jnp.bfloat16).astype(jnp.float32)
    B, C = V_S.shape
    x = jnp.stack([V_S, V_T, V_A], axis=1).reshape(3 * B, C).astype(jnp.float32)
    xb = x.astype(jnp.bfloat16).astype(jnp.float32)
    gate_logits = jnp.stack(
        [xb @ wg[m] + bg[m] for m in range(NUM_MIXTURES + 1)], axis=-1)
    gate_dist = jax.nn.softmax(gate_logits, axis=-1)[..., :NUM_MIXTURES]
    expert = jnp.stack(
        [jax.nn.sigmoid(xb @ we[m] + be[m]) for m in range(NUM_MIXTURES)], axis=-1)
    prob = jnp.sum(gate_dist * expert, axis=-1)
    return jax.nn.softmax(prob, axis=1)


if __name__ == "__main__":
    B, C = 2, 32  # small shapes consistent with the module (c = feature size)
    key = jax.random.PRNGKey(0)
    k_s, k_t, k_a, k_p = jax.random.split(key, 4)

    V_S = jax.random.normal(k_s, (B, C), jnp.float32)
    V_T = jax.random.normal(k_t, (B, C), jnp.float32)
    V_A = jax.random.normal(k_a, (B, C), jnp.float32)
    params = init_params(k_p, C)
    packed = pack_params(params, C)     # one-time packing, hoisted out of forward

    out = three_stream_forward(V_S, V_T, V_A, packed)
    out = jax.block_until_ready(out)

    ref = reference_forward(V_S, V_T, V_A, params)
    assert out.shape == (3 * B, C)
    # Tolerances account for bf16 weights/inputs and the approx (EUP) gate reciprocal.
    np.testing.assert_allclose(np.asarray(out), np.asarray(ref), rtol=2e-2, atol=2e-3)
    # Exact reciprocal in the final normalization -> rows sum to 1 within f32 rounding.
    np.testing.assert_allclose(
        np.asarray(out).sum(axis=1), np.ones(3 * B), rtol=0, atol=1e-3)

    print("KERNEL_OK")
</pallas_src>

<mosaic_0001>
module attributes {stable_mosaic.version = 11 : i64} {
  func.func @moe_softmax_kernel(%arg0: i32, %arg1: i32, %arg2: memref<16x128xbf16, #tpu.memory_space<vmem>>, %arg3: memref<128x896xbf16, #tpu.memory_space<vmem>>, %arg4: memref<1x896xf32, #tpu.memory_space<vmem>>, %arg5: memref<16x128xf32, #tpu.memory_space<vmem>>, %arg6: memref<1x16x128xf32, #tpu.memory_space<vmem>>, %arg7: memref<16x1xf32, #tpu.memory_space<vmem>>) attributes {dimension_semantics = [#tpu.dimension_semantics<arbitrary>, #tpu.dimension_semantics<arbitrary>], iteration_bounds = array<i64: 1, 2>, scalar_prefetch = 0 : i64, scratch_operands = 2 : i64, tpu.core_type = #tpu.core_type<tc>, window_params = [{transform_indices = @transform_0, window_bounds = array<i64: 16, 128>}, {transform_indices = @transform_1, window_bounds = array<i64: 128, 896>}, {transform_indices = @transform_2, window_bounds = array<i64: 1, 896>}, {transform_indices = @transform_3, window_bounds = array<i64: 16, 128>}]} {
    %c0_i32 = arith.constant 0 : i32
    %0 = arith.cmpi eq, %arg1, %c0_i32 : i32
    %1 = arith.extui %0 : i1 to i32
    %c0_i32_0 = arith.constant 0 : i32
    %2 = arith.cmpi ne, %1, %c0_i32_0 : i32
    scf.if %2 {
      %cst = arith.constant 0.000000e+00 : f32
      %9 = vector.broadcast %cst : f32 to vector<16x1xf32>
      %c0 = arith.constant 0 : index
      %c0_4 = arith.constant 0 : index
      %10 = vector.load %arg7[%c0, %c0_4] : memref<16x1xf32, #tpu.memory_space<vmem>>, vector<16x1xf32>
      tpu.vector_store %arg7[%c0, %c0_4], %9 {strides = array<i32>} : memref<16x1xf32, #tpu.memory_space<vmem>>, vector<16x1xf32>,
    } else {
    }
    %c1_i32 = arith.constant 1 : i32
    %3 = arith.cmpi slt, %arg1, %c1_i32 : i32
    %4 = arith.extui %3 : i1 to i32
    %c0_i32_1 = arith.constant 0 : i32
    %5 = arith.cmpi ne, %4, %c0_i32_1 : i32
    scf.if %5 {
      %c0 = arith.constant 0 : index
      %c0_4 = arith.constant 0 : index
      %9 = vector.load %arg2[%c0, %c0_4] : memref<16x128xbf16, #tpu.memory_space<vmem>>, vector<16x128xbf16>
      %c0_5 = arith.constant 0 : index
      %c0_6 = arith.constant 0 : index
      %10 = vector.load %arg3[%c0_5, %c0_6] : memref<128x896xbf16, #tpu.memory_space<vmem>>, vector<128x128xbf16>
      %cst = arith.constant dense<0.000000e+00> : vector<16x128xf32>
      %11 = tpu.matmul %9, %10, %cst {dimension_numbers = #tpu.dot_dimension_numbers<[1], [0], [0], [1], [0, 0, 1, 1], [], []>} : vector<16x128xbf16>, vector<128x128xbf16>, vector<16x128xf32> -> vector<16x128xf32>
      %c0_7 = arith.constant 0 : index
      %c0_8 = arith.constant 0 : index
      %12 = vector.load %arg4[%c0_7, %c0_8] : memref<1x896xf32, #tpu.memory_space<vmem>>, vector<1x128xf32>
      %13 = vector.broadcast %12 : vector<1x128xf32> to vector<16x128xf32>
      %14 = arith.addf %11, %13 : vector<16x128xf32>
      %c0_9 = arith.constant 0 : index
      %c128 = arith.constant 128 : index
      %15 = vector.load %arg3[%c0_9, %c128] : memref<128x896xbf16, #tpu.memory_space<vmem>>, vector<128x128xbf16>
      %cst_10 = arith.constant dense<0.000000e+00> : vector<16x128xf32>
      %16 = tpu.matmul %9, %15, %cst_10 {dimension_numbers = #tpu.dot_dimension_numbers<[1], [0], [0], [1], [0, 0, 1, 1], [], []>} : vector<16x128xbf16>, vector<128x128xbf16>, vector<16x128xf32> -> vector<16x128xf32>
      %c0_11 = arith.constant 0 : index
      %c128_12 = arith.constant 128 : index
      %17 = vector.load %arg4[%c0_11, %c128_12] : memref<1x896xf32, #tpu.memory_space<vmem>>, vector<1x128xf32>
      %18 = vector.broadcast %17 : vector<1x128xf32> to vector<16x128xf32>
      %19 = arith.addf %16, %18 : vector<16x128xf32>
      %c0_13 = arith.constant 0 : index
      %c256 = arith.constant 256 : index
      %20 = vector.load %arg3[%c0_13, %c256] : memref<128x896xbf16, #tpu.memory_space<vmem>>, vector<128x128xbf16>
      %cst_14 = arith.constant dense<0.000000e+00> : vector<16x128xf32>
      %21 = tpu.matmul %9, %20, %cst_14 {dimension_numbers = #tpu.dot_dimension_numbers<[1], [0], [0], [1], [0, 0, 1, 1], [], []>} : vector<16x128xbf16>, vector<128x128xbf16>, vector<16x128xf32> -> vector<16x128xf32>
      %c0_15 = arith.constant 0 : index
      %c256_16 = arith.constant 256 : index
      %22 = vector.load %arg4[%c0_15, %c256_16] : memref<1x896xf32, #tpu.memory_space<vmem>>, vector<1x128xf32>
      %23 = vector.broadcast %22 : vector<1x128xf32> to vector<16x128xf32>
      %24 = arith.addf %21, %23 : vector<16x128xf32>
      %c0_17 = arith.constant 0 : index
      %c384 = arith.constant 384 : index
      %25 = vector.load %arg3[%c0_17, %c384] : memref<128x896xbf16, #tpu.memory_space<vmem>>, vector<128x128xbf16>
      %cst_18 = arith.constant dense<0.000000e+00> : vector<16x128xf32>
      %26 = tpu.matmul %9, %25, %cst_18 {dimension_numbers = #tpu.dot_dimension_numbers<[1], [0], [0], [1], [0, 0, 1, 1], [], []>} : vector<16x128xbf16>, vector<128x128xbf16>, vector<16x128xf32> -> vector<16x128xf32>
      %c0_19 = arith.constant 0 : index
      %c384_20 = arith.constant 384 : index
      %27 = vector.load %arg4[%c0_19, %c384_20] : memref<1x896xf32, #tpu.memory_space<vmem>>, vector<1x128xf32>
      %28 = vector.broadcast %27 : vector<1x128xf32> to vector<16x128xf32>
      %29 = arith.addf %26, %28 : vector<16x128xf32>
      %30 = arith.maximumf %14, %19 : vector<16x128xf32>
      %31 = arith.maximumf %24, %29 : vector<16x128xf32>
      %32 = arith.maximumf %30, %31 : vector<16x128xf32>
      %33 = arith.subf %14, %32 : vector<16x128xf32>
      %34 = math.exp %33 : vector<16x128xf32>
      %35 = arith.subf %19, %32 : vector<16x128xf32>
      %36 = math.exp %35 : vector<16x128xf32>
      %37 = arith.subf %24, %32 : vector<16x128xf32>
      %38 = math.exp %37 : vector<16x128xf32>
      %39 = arith.subf %29, %32 : vector<16x128xf32>
      %40 = math.exp %39 : vector<16x128xf32>
      %41 = arith.addf %34, %36 : vector<16x128xf32>
      %42 = arith.addf %41, %38 : vector<16x128xf32>
      %43 = arith.addf %42, %40 : vector<16x128xf32>
      %44 = tpu.reciprocal %43 {approx = true} : vector<16x128xf32> -> vector<16x128xf32>
      %cst_21 = arith.constant 0.000000e+00 : f32
      %45 = vector.broadcast %cst_21 : f32 to vector<16x128xf32>
      %c0_22 = arith.constant 0 : index
      %c512 = arith.constant 512 : index
      %46 = vector.load %arg3[%c0_22, %c512] : memref<128x896xbf16, #tpu.memory_space<vmem>>, vector<128x128xbf16>
      %cst_23 = arith.constant dense<0.000000e+00> : vector<16x128xf32>
      %47 = tpu.matmul %9, %46, %cst_23 {dimension_numbers = #tpu.dot_dimension_numbers<[1], [0], [0], [1], [0, 0, 1, 1], [], []>} : vector<16x128xbf16>, vector<128x128xbf16>, vector<16x128xf32> -> vector<16x128xf32>
      %c0_24 = arith.constant 0 : index
      %c512_25 = arith.constant 512 : index
      %48 = vector.load %arg4[%c0_24, %c512_25] : memref<1x896xf32, #tpu.memory_space<vmem>>, vector<1x128xf32>
      %49 = vector.broadcast %48 : vector<1x128xf32> to vector<16x128xf32>
      %50 = arith.addf %47, %49 : vector<16x128xf32>
      %51 = arith.mulf %34, %44 : vector<16x128xf32>
      %52 = arith.negf %50 : vector<16x128xf32>
      %53 = math.exp %52 : vector<16x128xf32>
      %cst_26 = arith.constant 1.000000e+00 : f32
      %54 = vector.broadcast %cst_26 : f32 to vector<16x128xf32>
      %55 = arith.addf %54, %53 : vector<16x128xf32>
      %56 = arith.divf %54, %55 : vector<16x128xf32>
      %57 = arith.mulf %51, %56 : vector<16x128xf32>
      %58 = arith.addf %45, %57 : vector<16x128xf32>
      %c0_27 = arith.constant 0 : index
      %c640 = arith.constant 640 : index
      %59 = vector.load %arg3[%c0_27, %c640] : memref<128x896xbf16, #tpu.memory_space<vmem>>, vector<128x128xbf16>
      %cst_28 = arith.constant dense<0.000000e+00> : vector<16x128xf32>
      %60 = tpu.matmul %9, %59, %cst_28 {dimension_numbers = #tpu.dot_dimension_numbers<[1], [0], [0], [1], [0, 0, 1, 1], [], []>} : vector<16x128xbf16>, vector<128x128xbf16>, vector<16x128xf32> -> vector<16x128xf32>
      %c0_29 = arith.constant 0 : index
      %c640_30 = arith.constant 640 : index
      %61 = vector.load %arg4[%c0_29, %c640_30] : memref<1x896xf32, #tpu.memory_space<vmem>>, vector<1x128xf32>
      %62 = vector.broadcast %61 : vector<1x128xf32> to vector<16x128xf32>
      %63 = arith.addf %60, %62 : vector<16x128xf32>
      %64 = arith.mulf %36, %44 : vector<16x128xf32>
      %65 = arith.negf %63 : vector<16x128xf32>
      %66 = math.exp %65 : vector<16x128xf32>
      %cst_31 = arith.constant 1.000000e+00 : f32
      %67 = vector.broadcast %cst_31 : f32 to vector<16x128xf32>
      %68 = arith.addf %67, %66 : vector<16x128xf32>
      %69 = arith.divf %67, %68 : vector<16x128xf32>
      %70 = arith.mulf %64, %69 : vector<16x128xf32>
      %71 = arith.addf %58, %70 : vector<16x128xf32>
      %c0_32 = arith.constant 0 : index
      %c768 = arith.constant 768 : index
      %72 = vector.load %arg3[%c0_32, %c768] : memref<128x896xbf16, #tpu.memory_space<vmem>>, vector<128x128xbf16>
      %cst_33 = arith.constant dense<0.000000e+00> : vector<16x128xf32>
      %73 = tpu.matmul %9, %72, %cst_33 {dimension_numbers = #tpu.dot_dimension_numbers<[1], [0], [0], [1], [0, 0, 1, 1], [], []>} : vector<16x128xbf16>, vector<128x128xbf16>, vector<16x128xf32> -> vector<16x128xf32>
      %c0_34 = arith.constant 0 : index
      %c768_35 = arith.constant 768 : index
      %74 = vector.load %arg4[%c0_34, %c768_35] : memref<1x896xf32, #tpu.memory_space<vmem>>, vector<1x128xf32>
      %75 = vector.broadcast %74 : vector<1x128xf32> to vector<16x128xf32>
      %76 = arith.addf %73, %75 : vector<16x128xf32>
      %77 = arith.mulf %38, %44 : vector<16x128xf32>
      %78 = arith.negf %76 : vector<16x128xf32>
      %79 = math.exp %78 : vector<16x128xf32>
      %cst_36 = arith.constant 1.000000e+00 : f32
      %80 = vector.broadcast %cst_36 : f32 to vector<16x128xf32>
      %81 = arith.addf %80, %79 : vector<16x128xf32>
      %82 = arith.divf %80, %81 : vector<16x128xf32>
      %83 = arith.mulf %77, %82 : vector<16x128xf32>
      %84 = arith.addf %71, %83 : vector<16x128xf32>
      %85 = math.exp %84 : vector<16x128xf32>
      %c128_i32 = arith.constant 128 : i32
      %86 = arith.muli %arg1, %c128_i32 : i32
      %87 = tpu.iota {dimensions = array<i32: 1>} : vector<16x128xi32>
      %88 = vector.broadcast %86 : i32 to vector<16x128xi32>
      %89 = arith.addi %88, %87 : vector<16x128xi32>
      %c32_i32 = arith.constant 32 : i32
      %90 = vector.broadcast %c32_i32 : i32 to vector<16x128xi32>
      %91 = arith.cmpi slt, %89, %90 : vector<16x128xi32>
      %cst_37 = arith.constant 0.000000e+00 : f32
      %92 = vector.broadcast %cst_37 : f32 to vector<16x128xf32>
      %93 = arith.select %91, %85, %92 : vector<16x128xi1>, vector<16x128xf32>
      %94 = arith.index_cast %arg1 : i32 to index
      %c0_38 = arith.constant 0 : index
      %c0_39 = arith.constant 0 : index
      %95 = vector.load %arg6[%94, %c0_38, %c0_39] : memref<1x16x128xf32, #tpu.memory_space<vmem>>, vector<1x16x128xf32>
      %96 = vector.shape_cast %95 : vector<1x16x128xf32> to vector<16x128xf32>
      %97 = vector.shape_cast %93 : vector<16x128xf32> to vector<1x16x128xf32>
      tpu.vector_store %arg6[%94, %c0_38, %c0_39], %97 {strides = array<i32>} : memref<1x16x128xf32, #tpu.memory_space<vmem>>, vector<1x16x128xf32>,
      %c0_40 = arith.constant 0 : index
      %c0_41 = arith.constant 0 : index
      %98 = vector.load %arg7[%c0_40, %c0_41] : memref<16x1xf32, #tpu.memory_space<vmem>>, vector<16x1xf32>
      %cst_42 = arith.constant dense<0.000000e+00> : vector<16xf32>
      %99 = vector.multi_reduction <add>, %93, %cst_42 [1] : vector<16x128xf32> to vector<16xf32>
      %100 = vector.shape_cast %99 : vector<16xf32> to vector<16x1xf32>
      %101 = arith.addf %98, %100 : vector<16x1xf32>
      %c0_43 = arith.constant 0 : index
      %c0_44 = arith.constant 0 : index
      %102 = vector.load %arg7[%c0_43, %c0_44] : memref<16x1xf32, #tpu.memory_space<vmem>>, vector<16x1xf32>
      tpu.vector_store %arg7[%c0_43, %c0_44], %101 {strides = array<i32>} : memref<16x1xf32, #tpu.memory_space<vmem>>, vector<16x1xf32>,
    } else {
    }
    %c1_i32_2 = arith.constant 1 : i32
    %6 = arith.cmpi sge, %arg1, %c1_i32_2 : i32
    %7 = arith.extui %6 : i1 to i32
    %c0_i32_3 = arith.constant 0 : i32
    %8 = arith.cmpi ne, %7, %c0_i32_3 : i32
    scf.if %8 {
      %c1_i32_4 = arith.constant 1 : i32
      %9 = arith.subi %arg1, %c1_i32_4 : i32
      %10 = arith.index_cast %9 : i32 to index
      %c0 = arith.constant 0 : index
      %c0_5 = arith.constant 0 : index
      %11 = vector.load %arg6[%10, %c0, %c0_5] : memref<1x16x128xf32, #tpu.memory_space<vmem>>, vector<1x16x128xf32>
      %12 = vector.shape_cast %11 : vector<1x16x128xf32> to vector<16x128xf32>
      %c0_6 = arith.constant 0 : index
      %c0_7 = arith.constant 0 : index
      %13 = vector.load %arg7[%c0_6, %c0_7] : memref<16x1xf32, #tpu.memory_space<vmem>>, vector<16x1xf32>
      %cst = arith.constant 1.000000e+00 : f32
      %14 = vector.broadcast %cst : f32 to vector<16x1xf32>
      %15 = arith.divf %14, %13 : vector<16x1xf32>
      %16 = vector.broadcast %15 : vector<16x1xf32> to vector<16x128xf32>
      %17 = arith.mulf %12, %16 : vector<16x128xf32>
      %c0_8 = arith.constant 0 : index
      %c0_9 = arith.constant 0 : index
      %18 = vector.load %arg5[%c0_8, %c0_9] : memref<16x128xf32, #tpu.memory_space<vmem>>, vector<16x128xf32>
      tpu.vector_store %arg5[%c0_8, %c0_9], %17 {strides = array<i32>} : memref<16x128xf32, #tpu.memory_space<vmem>>, vector<16x128xf32>,
    } else {
    }
    return
  }
  func.func @transform_0(%arg0: i32, %arg1: i32) -> (i32, i32) {
    %c0_i32 = arith.constant 0 : i32
    %c0_i32_0 = arith.constant 0 : i32
    return %arg0, %c0_i32 : i32, i32
  }
  func.func @transform_1(%arg0: i32, %arg1: i32) -> (i32, i32) {
    %c0_i32 = arith.constant 0 : i32
    %0 = arith.minsi %arg1, %c0_i32 : i32
    %c0_i32_0 = arith.constant 0 : i32
    %c0_i32_1 = arith.constant 0 : i32
    return %c0_i32_0, %0 : i32, i32
  }
  func.func @transform_2(%arg0: i32, %arg1: i32) -> (i32, i32) {
    %c0_i32 = arith.constant 0 : i32
    %0 = arith.minsi %arg1, %c0_i32 : i32
    %c0_i32_0 = arith.constant 0 : i32
    %c0_i32_1 = arith.constant 0 : i32
    return %c0_i32_0, %0 : i32, i32
  }
  func.func @transform_3(%arg0: i32, %arg1: i32) -> (i32, i32) {
    %c1_i32 = arith.constant 1 : i32
    %0 = arith.subi %arg1, %c1_i32 : i32
    %c0_i32 = arith.constant 0 : i32
    %1 = arith.maxsi %0, %c0_i32 : i32
    %c0_i32_0 = arith.constant 0 : i32
    return %arg0, %1 : i32, i32
  }
}

</mosaic_0001>

<llo_original>
// kernel: tpu_custom_call.1
$region0: #{tpu_custom_call.1}
  #allocation0 [shape = 'u32[]', space=smem, size = 0x4, offset = 0x4, fixed_abs, tag = 'smem constant byte address 0x4 - core index']
  #allocation1 [shape = 'u32[72,128]{1,0:T(1,128)}', space=vmem, size = 0x9000, scoped, tag = 'internal scratch']
  #allocation2 [shape = 'f32[1,16,128]{2,1,0:T(8,128)}', space=vmem, size = 0x2000, scoped, tag = 'scratch operand']
  #allocation3 [shape = 'f32[16,1]{1,0:T(8,128)}', space=vmem, size = 0x2000, scoped, tag = 'scratch operand']
  %s0 = inlined_call_operand.hbm [shape: bf16[16,128], index: 0, kind: input, shape index: {}]
  %s1 = inlined_call_operand.hbm [shape: bf16[128,896], index: 1, kind: input, shape index: {}]
  %s2 = inlined_call_operand.hbm [shape: f32[1,896], index: 2, kind: input, shape index: {}]
  %s3 = inlined_call_operand.hbm [shape: f32[16,128], index: 3, kind: output, shape index: {}]
  %s4 = sld [smem:[#allocation0]]
  $region69: #{tpu_custom_call.1} parent=0
    _
  %s6 = ssub.s32 1, %s4
  %s7 = scalar_select 0, %s6, %s4
  $region1: #{tpu_custom_call.1} parent=0
    #allocation4 [shape = 'u8[4096]{0}', space=vmem, size = 0x1000, scoped, tag = 'input window, operand 0, single buffered']
    #allocation5 [shape = 's32[2]{0}', space=sflag, size = 0x8, scoped, tag = 'scoped memory for tpu_custom_call.1']
    #allocation6 [shape = 's32[2]{0}', space=sflag, size = 0x8, scoped, tag = 'scoped memory for tpu_custom_call.1']
    #allocation7 [shape = 'u8[458752]{0}', space=vmem, size = 0x70000, scoped, tag = 'input window, operand 1']
    #allocation8 [shape = 's32[2]{0}', space=sflag, size = 0x8, scoped, tag = 'scoped memory for tpu_custom_call.1']
    #allocation9 [shape = 'u8[7168]{0}', space=vmem, size = 0x1c00, scoped, tag = 'input window, operand 2']
    #allocation10 [shape = 'u8[16384]{0}', space=vmem, size = 0x4000, scoped, tag = 'output window, operand 0']
    %8 = vsyncpa [#allocation5], 0
    %9 = vsyncpa [#allocation8], 0
    %s10 = scalar_lea.sflag [#allocation8], 1
    %11 = vsyncpa %s10, 0
    %12 = vsyncpa [#allocation6], 0
    %s13 = scalar_lea.sflag [#allocation6], 1
    %14 = vsyncpa %s13, 0
    loop: start=0, step=1, limit=4
    $region2: #{tpu_custom_call.1} parent=1 // loop_pre_header
      _
    $region3: #{tpu_custom_call.1} parent=1 // loop_header
      %s16 = sphi 0, %s20
      %p17 = scmp.ge.s32.totalorder %s16, 4
      %s23 = sphi 0, %s35
      %s24 = sphi 0, %s31
      %s25 = sphi 0, %s23
      %s26 = sphi 0, %s24
      %s27 = sphi 0, %s25
      %s28 = sphi 0, %s26
      %s38 = sphi 0, %s40
      %s41 = sphi 0, %s38
      %s42 = sphi 0, %s41
      %s58 = sphi 0, %s42
      %s68 = sphi 0, %s70
      %s71 = sphi 0, %s68
      %s72 = sphi 0, %s71
      %s88 = sphi 0, %s72
      %s98 = sphi 0, %s100
      %s101 = sphi 0, %s98
      %s102 = sphi 0, %s101
      %s118 = sphi 0, %s102
      %s132 = sphi 0, %s134
      %s135 = sphi 0, %s132
      %s136 = sphi 0, %s135
      %s152 = sphi 0, %s136
    $region4: #{tpu_custom_call.1} parent=1 // loop_header_branch
      %19 = sbr.rel (%p17) target = $region8
    $region5: #{tpu_custom_call.1} parent=1 // loop_body
      %s21 = ssub.s32 %s16, 1
      %s22 = ssub.s32 %s16, 2
      %s29 = sadd.s32 1, %s24
      %p30 = scmp.ge.s32.totalorder %s29, 2
      %s31 = scalar_select %p30, 0, %s29
      %s32 = sadd.s32 1, %s23
      %s33 = scalar_select %p30, %s32, %s23
      %p34 = scmp.ge.s32.totalorder %s33, 1
      %s35 = scalar_select %p34, 0, %s33
      %s36 = ssub.s32 %s23, %s35
      %p37 = scmp.eq.s32.totalorder %s36, 0
      %s39 = sadd.s32 %s38, 1
      %s40 = scalar_select %p37, %s38, %s39
      %p43 = pneg %p37
      %p44 = scmp.eq.s32.totalorder %s16, 1
      %p45 = por %p43, %p44
      %p46 = scmp.ne.s32.totalorder %s38, %s41
      %p47 = scmp.eq.s32.totalorder %s16, 0
      %p48 = por %p46, %p47
      %p49 = scmp.ne.s32.totalorder %s38, %s41
      %p50 = scmp.eq.s32.totalorder %s21, 1
      %p51 = por %p49, %p50
      %p52 = scmp.ne.s32.totalorder %s41, %s42
      %p53 = scmp.eq.s32.totalorder %s21, 0
      %p54 = por %p52, %p53
      %p55 = scmp.ne.s32.totalorder %s41, %s42
      %p56 = scmp.eq.s32.totalorder %s22, 1
      %p57 = por %p55, %p56
      %p59 = scmp.ne.s32.totalorder %s42, %s58
      %p60 = scmp.eq.s32.totalorder %s22, 0
      %p61 = por %p59, %p60
      %p62 = scmp.lt.s32.totalorder %s24, 0
      %s63 = scalar_select %p62, %s24, 0
      %p64 = scmp.lt.s32.totalorder %s31, 0
      %s65 = scalar_select %p64, %s31, 0
      %s66 = ssub.s32 %s63, %s65
      %p67 = scmp.eq.s32.totalorder %s66, 0
      %s69 = sadd.s32 %s68, 1
      %s70 = scalar_select %p67, %s68, %s69
      %p73 = pneg %p67
      %p74 = scmp.eq.s32.totalorder %s16, 1
      %p75 = por %p73, %p74
      %p76 = scmp.ne.s32.totalorder %s68, %s71
      %p77 = scmp.eq.s32.totalorder %s16, 0
      %p78 = por %p76, %p77
      %p79 = scmp.ne.s32.totalorder %s68, %s71
      %p80 = scmp.eq.s32.totalorder %s21, 1
      %p81 = por %p79, %p80
      %p82 = scmp.ne.s32.totalorder %s71, %s72
      %p83 = scmp.eq.s32.totalorder %s21, 0
      %p84 = por %p82, %p83
      %p85 = scmp.ne.s32.totalorder %s71, %s72
      %p86 = scmp.eq.s32.totalorder %s22, 1
      %p87 = por %p85, %p86
      %p89 = scmp.ne.s32.totalorder %s72, %s88
      %p90 = scmp.eq.s32.totalorder %s22, 0
      %p91 = por %p89, %p90
      %p92 = scmp.lt.s32.totalorder %s24, 0
      %s93 = scalar_select %p92, %s24, 0
      %p94 = scmp.lt.s32.totalorder %s31, 0
      %s95 = scalar_select %p94, %s31, 0
      %s96 = ssub.s32 %s93, %s95
      %p97 = scmp.eq.s32.totalorder %s96, 0
      %s99 = sadd.s32 %s98, 1
      %s100 = scalar_select %p97, %s98, %s99
      %p103 = pneg %p97
      %p104 = scmp.eq.s32.totalorder %s16, 1
      %p105 = por %p103, %p104
      %p106 = scmp.ne.s32.totalorder %s98, %s101
      %p107 = scmp.eq.s32.totalorder %s16, 0
      %p108 = por %p106, %p107
      %p109 = scmp.ne.s32.totalorder %s98, %s101
      %p110 = scmp.eq.s32.totalorder %s21, 1
      %p111 = por %p109, %p110
      %p112 = scmp.ne.s32.totalorder %s101, %s102
      %p113 = scmp.eq.s32.totalorder %s21, 0
      %p114 = por %p112, %p113
      %p115 = scmp.ne.s32.totalorder %s101, %s102
      %p116 = scmp.eq.s32.totalorder %s22, 1
      %p117 = por %p115, %p116
      %p119 = scmp.ne.s32.totalorder %s102, %s118
      %p120 = scmp.eq.s32.totalorder %s22, 0
      %p121 = por %p119, %p120
      %s122 = ssub.s32 %s24, 1
      %p123 = scmp.gt.s32.totalorder %s122, 0
      %s124 = scalar_select %p123, %s122, 0
      %s125 = ssub.s32 %s31, 1
      %p126 = scmp.gt.s32.totalorder %s125, 0
      %s127 = scalar_select %p126, %s125, 0
      %s128 = ssub.s32 %s23, %s35
      %s129 = ssub.s32 %s124, %s127
      %s130 = sor.u32 %s128, %s129
      %p131 = scmp.eq.s32.totalorder %s130, 0
      %s133 = sadd.s32 %s132, 1
      %s134 = scalar_select %p131, %s132, %s133
      %p137 = pneg %p131
      %p138 = scmp.eq.s32.totalorder %s16, 1
      %p139 = por %p137, %p138
      %p140 = scmp.ne.s32.totalorder %s132, %s135
      %p141 = scmp.eq.s32.totalorder %s16, 0
      %p142 = por %p140, %p141
      %p143 = scmp.ne.s32.totalorder %s132, %s135
      %p144 = scmp.eq.s32.totalorder %s21, 1
      %p145 = por %p143, %p144
      %p146 = scmp.ne.s32.totalorder %s135, %s136
      %p147 = scmp.eq.s32.totalorder %s21, 0
      %p148 = por %p146, %p147
      %p149 = scmp.ne.s32.totalorder %s135, %s136
      %p150 = scmp.eq.s32.totalorder %s22, 1
      %p151 = por %p149, %p150
      %p153 = scmp.ne.s32.totalorder %s136, %s152
      %p154 = scmp.eq.s32.totalorder %s22, 0
      %p155 = por %p153, %p154
      %p156 = scmp.le.s32.totalorder 1, %s16
      %p157 = scmp.lt.s32.totalorder %s16, 3
      %p158 = pnand %p156, %p157
      %p159 = pneg %p158
      // Predicated region
      $region9: #{tpu_custom_call.1} parent=5 // pred_check
        _
      $region10: #{tpu_custom_call.1} parent=5 // pred_check_branch
        %161 = sbr.rel (%p158) target = $region12
      $region11: #{tpu_custom_call.1} parent=5 // pred_region
        %s162 = ssub.s32 %s16, 1
        // Predicated region
        $region13: #{tpu_custom_call.1} parent=11 // pred_check
          %p163 = pneg %p54
        $region14: #{tpu_custom_call.1} parent=11 // pred_check_branch
          %165 = sbr.rel (%p163) target = $region16
        $region15: #{tpu_custom_call.1} parent=11 // pred_region
          %s166 = smul.u32 2, %s25
          %168 = vsyncadd [#allocation5], 0
          %s169 = smul.addr %s166, 4
          %s170 = scalar_lea.hbm %s0, %s169
          %s171 = sshll.u32 %s170, 4
          %s172 = int_to_ptr.hbm [resolvable:$true] %s171
          %s173 = sshll.u32 [#allocation4], 4
          %s174 = int_to_ptr.vmem [resolvable:$true] %s173
          %179 = dma.hbm_to_vmem [thread:$0]  %s172, 128, %s174, [#allocation5], 64, 64, 4
        $region16: #{tpu_custom_call.1} parent=11 // pred_fallthru
          _
      $region12: #{tpu_custom_call.1} parent=5 // pred_fallthru
        _
      %p180 = scmp.lt.s32.totalorder %s16, 2
      // Predicated region
      $region17: #{tpu_custom_call.1} parent=5 // pred_check
        %p181 = pneg %p180
      $region18: #{tpu_custom_call.1} parent=5 // pred_check_branch
        %183 = sbr.rel (%p181) target = $region20
      $region19: #{tpu_custom_call.1} parent=5 // pred_region
        // Predicated region
        $region21: #{tpu_custom_call.1} parent=19 // pred_check
          %p184 = pneg %p78
        $region22: #{tpu_custom_call.1} parent=19 // pred_check_branch
          %186 = sbr.rel (%p184) target = $region24
        $region23: #{tpu_custom_call.1} parent=19 // pred_region
          %s187 = sand.u32 %s16, 1
          %s188 = scalar_lea.sflag [#allocation8], %s187
          %s189 = sand.u32 %s68, 1
          %s190 = smul.addr %s189, 448
          %s191 = scalar_lea.vmem [#allocation7], %s190
          %p192 = scmp.lt.s32.totalorder %s24, 0
          %s193 = scalar_select %p192, %s24, 0
          %s194 = smul.u32 7, %s193
          %196 = vsyncadd %s188, 0
          %s197 = smul.addr %s194, 4
          %s198 = scalar_lea.hbm %s1, %s197
          %s199 = sshll.u32 %s198, 4
          %s200 = int_to_ptr.hbm [resolvable:$true] %s199
          %s201 = sshll.u32 %s191, 4
          %s202 = int_to_ptr.vmem [resolvable:$true] %s201
          %207 = dma.hbm_to_vmem [thread:$0]  %s200, 7168, %s202, %s188, 448, 448, 28
        $region24: #{tpu_custom_call.1} parent=19 // pred_fallthru
          _
        // Predicated region
        $region25: #{tpu_custom_call.1} parent=19 // pred_check
          %p208 = pneg %p108
        $region26: #{tpu_custom_call.1} parent=19 // pred_check_branch
          %210 = sbr.rel (%p208) target = $region28
        $region27: #{tpu_custom_call.1} parent=19 // pred_region
          %s211 = sand.u32 %s16, 1
          %s212 = scalar_lea.sflag [#allocation8], %s211
          %s213 = sand.u32 %s98, 1
          %s214 = smul.addr %s213, 7
          %s215 = scalar_lea.vmem [#allocation9], %s214
          %p216 = scmp.lt.s32.totalorder %s24, 0
          %s217 = scalar_select %p216, %s24, 0
          %s218 = smul.u32 7, %s217
          %220 = vsyncadd %s212, 0
          %s221 = scalar_lea.hbm %s2, %s218
          %s223 = sshll.u32 %s221, 4
          %s224 = int_to_ptr.hbm [resolvable:$true] %s223
          %s225 = sshll.u32 %s215, 4
          %s226 = int_to_ptr.vmem [resolvable:$true] %s225
          %228 = dma.hbm_to_vmem [thread:$0]  %s224, 112, %s226, %s212
        $region28: #{tpu_custom_call.1} parent=19 // pred_fallthru
          _
      $region20: #{tpu_custom_call.1} parent=5 // pred_fallthru
        _
      %p229 = scmp.le.s32.totalorder 1, %s16
      %p230 = scmp.lt.s32.totalorder %s16, 3
      %p231 = pnand %p229, %p230
      %p232 = pneg %p231
      // Predicated region
      $region29: #{tpu_custom_call.1} parent=5 // pred_check
        _
      $region30: #{tpu_custom_call.1} parent=5 // pred_check_branch
        %234 = sbr.rel (%p231) target = $region32
      $region31: #{tpu_custom_call.1} parent=5 // pred_region
        %s235 = ssub.s32 %s16, 1
        // Predicated region
        $region33: #{tpu_custom_call.1} parent=31 // pred_check
          %p236 = pneg %p54
        $region34: #{tpu_custom_call.1} parent=31 // pred_check_branch
          %238 = sbr.rel (%p236) target = $region36
        $region35: #{tpu_custom_call.1} parent=31 // pred_region
          %240 = dma.done [#allocation5], 128
        $region36: #{tpu_custom_call.1} parent=31 // pred_fallthru
          _
        %s241 = sand.u32 %s21, 1
        %s242 = scalar_lea.sflag [#allocation8], %s241
        %s243 = sand.u32 %s71, 1
        %s244 = smul.addr %s243, 448
        %s245 = scalar_lea.vmem [#allocation7], %s244
        // Predicated region
        $region37: #{tpu_custom_call.1} parent=31 // pred_check
          %p246 = pneg %p84
        $region38: #{tpu_custom_call.1} parent=31 // pred_check_branch
          %248 = sbr.rel (%p246) target = $region40
        $region39: #{tpu_custom_call.1} parent=31 // pred_region
          %250 = dma.done %s242, 7168
        $region40: #{tpu_custom_call.1} parent=31 // pred_fallthru
          _
        %s251 = sand.u32 %s21, 1
        %s252 = scalar_lea.sflag [#allocation8], %s251
        %s253 = sand.u32 %s101, 1
        %s254 = smul.addr %s253, 7
        %s255 = scalar_lea.vmem [#allocation9], %s254
        // Predicated region
        $region41: #{tpu_custom_call.1} parent=31 // pred_check
          %p256 = pneg %p114
        $region42: #{tpu_custom_call.1} parent=31 // pred_check_branch
          %258 = sbr.rel (%p256) target = $region44
        $region43: #{tpu_custom_call.1} parent=31 // pred_region
          %260 = dma.done %s252, 112
        $region44: #{tpu_custom_call.1} parent=31 // pred_fallthru
          _
        %p261 = pneg %p54
        %p262 = pneg %p51
        %s263 = sand.u32 %s21, 1
        %s264 = scalar_lea.sflag [#allocation8], %s263
        %s265 = sand.u32 %s71, 1
        %s266 = smul.addr %s265, 448
        %s267 = scalar_lea.vmem [#allocation7], %s266
        %p268 = pneg %p84
        %p269 = pneg %p81
        %s270 = sand.u32 %s21, 1
        %s271 = scalar_lea.sflag [#allocation8], %s270
        %s272 = sand.u32 %s101, 1
        %s273 = smul.addr %s272, 7
        %s274 = scalar_lea.vmem [#allocation9], %s273
        %p275 = pneg %p114
        %p276 = pneg %p111
        %p277 = pneg %p148
        %p278 = pneg %p145
        %s279 = sand.u32 %s135, 1
        %s280 = scalar_lea.sflag [#allocation6], %s279
        %s281 = sand.u32 %s135, 1
        %s282 = smul.addr %s281, 16
        %s283 = scalar_lea.vmem [#allocation10], %s282
        %s284 = smul.u32 2, %s25
        %p285 = scmp.lt.s32.totalorder %s26, 0
        %s286 = scalar_select %p285, %s26, 0
        %s287 = smul.u32 7, %s286
        %p288 = scmp.lt.s32.totalorder %s26, 0
        %s289 = scalar_select %p288, %s26, 0
        %s290 = smul.u32 7, %s289
        %s291 = ssub.s32 %s26, 1
        %p292 = scmp.gt.s32.totalorder %s291, 0
        %s293 = scalar_select %p292, %s291, 0
        %s294 = smul.u32 2, %s25
        %p295 = scmp.eq.s32.totalorder %s26, 0
        // Predicated region
        $region45: #{tpu_custom_call.1} parent=31 // pred_check
          %p296 = pneg %p295
        $region46: #{tpu_custom_call.1} parent=31 // pred_check_branch
          %298 = sbr.rel (%p296) target = $region48
        $region47: #{tpu_custom_call.1} parent=31 // pred_region
          %vm299 = vcmask 7168
          %300 = vst.msk [vmem:[#allocation3] sm:$0xff] %vm299, 0.0
          %301 = vst.msk [vmem:[#allocation3 + $0x8] sm:$0xff] %vm299, 0.0
        $region48: #{tpu_custom_call.1} parent=31 // pred_fallthru
          _
        %p302 = scmp.lt.s32.totalorder %s26, 1
        // Predicated region
        $region49: #{tpu_custom_call.1} parent=31 // pred_check
          %p303 = pneg %p302
        $region50: #{tpu_custom_call.1} parent=31 // pred_check_branch
          %305 = sbr.rel (%p303) target = $region52
        $region51: #{tpu_custom_call.1} parent=31 // pred_region
          %v306 = vld [vmem:[#allocation4] sm:$0xf]
          %v307 = vld [vmem:[#allocation4 + $0x4] sm:$0xf]
          %v308 = vld [vmem:[%s245] sm:$0xf]
          %v309 = vld [vmem:[%s245 + $0x1c] sm:$0xf]
          %v310 = vld [vmem:[%s245 + $0x38] sm:$0xf]
          %v311 = vld [vmem:[%s245 + $0x54] sm:$0xf]
          %v312 = vld [vmem:[%s245 + $0x70] sm:$0xf]
          %v313 = vld [vmem:[%s245 + $0x8c] sm:$0xf]
          %v314 = vld [vmem:[%s245 + $0xa8] sm:$0xf]
          %v315 = vld [vmem:[%s245 + $0xc4] sm:$0xf]
          %v316 = vld [vmem:[%s245 + $0xe0] sm:$0xf]
          %v317 = vld [vmem:[%s245 + $0xfc] sm:$0xf]
          %v318 = vld [vmem:[%s245 + $0x118] sm:$0xf]
          %v319 = vld [vmem:[%s245 + $0x134] sm:$0xf]
          %v320 = vld [vmem:[%s245 + $0x150] sm:$0xf]
          %v321 = vld [vmem:[%s245 + $0x16c] sm:$0xf]
          %v322 = vld [vmem:[%s245 + $0x188] sm:$0xf]
          %v323 = vld [vmem:[%s245 + $0x1a4] sm:$0xf]
          %v324 = vld [vmem:[%s255] sm:$0x1]
          %v326 = vperm.slane %v324, 0
          %v330 = vunpack.c.l.b16 %v306
          %v331 = vunpack.c.l.b16 %v307
          %v332 = vpack.c.b16 %v331, %v330
          %v350 = vunpack.c.l.b16 %v308
          %v351 = vunpack.c.l.b16 %v309
          %v352 = vunpack.c.l.b16 %v310
          %v353 = vunpack.c.l.b16 %v311
          %v354 = vunpack.c.l.b16 %v312
          %v355 = vunpack.c.l.b16 %v313
          %v356 = vunpack.c.l.b16 %v314
          %v357 = vunpack.c.l.b16 %v315
          %v358 = vunpack.c.l.b16 %v316
          %v359 = vunpack.c.l.b16 %v317
          %v360 = vunpack.c.l.b16 %v318
          %v361 = vunpack.c.l.b16 %v319
          %v362 = vunpack.c.l.b16 %v320
          %v363 = vunpack.c.l.b16 %v321
          %v364 = vunpack.c.l.b16 %v322
          %v365 = vunpack.c.l.b16 %v323
          %v366 = vpack.c.b16 %v351, %v350
          %v367 = vpack.c.b16 %v353, %v352
          %v368 = vpack.c.b16 %v355, %v354
          %v369 = vpack.c.b16 %v357, %v356
          %v370 = vpack.c.b16 %v359, %v358
          %v371 = vpack.c.b16 %v361, %v360
          %v372 = vpack.c.b16 %v363, %v362
          %v373 = vpack.c.b16 %v365, %v364
          %382 = vmatpush.bf16.msra.mxu0 %v373
          %383 = vmatpush.bf16.msra.mxu0 %v372
          %384 = vmatpush.bf16.msra.mxu0 %v371
          %385 = vmatpush.bf16.msra.mxu0 %v370
          %386 = vmatpush.bf16.msra.mxu0 %v369
          %387 = vmatpush.bf16.msra.mxu0 %v368
          %388 = vmatpush.bf16.msra.mxu0 %v367
          %389 = vmatpush.bf16.msra.mxu0 %v366
          %390 = vmatmul.bf16.gmra.mxu0 %v332
          %v391 = vpop.f32.mrf.mxu0
          %v392 = vadd.f32 %v326, %v391
          %v393 = vpop.f32.mrf.mxu0
          %v394 = vadd.f32 %v326, %v393
          %395 = vdwg.mxu0
          %v396 = vld [vmem:[%s245 + $0x4] sm:$0xf]
          %v397 = vld [vmem:[%s245 + $0x20] sm:$0xf]
          %v398 = vld [vmem:[%s245 + $0x3c] sm:$0xf]
          %v399 = vld [vmem:[%s245 + $0x58] sm:$0xf]
          %v400 = vld [vmem:[%s245 + $0x74] sm:$0xf]
          %v401 = vld [vmem:[%s245 + $0x90] sm:$0xf]
          %v402 = vld [vmem:[%s245 + $0xac] sm:$0xf]
          %v403 = vld [vmem:[%s245 + $0xc8] sm:$0xf]
          %v404 = vld [vmem:[%s245 + $0xe4] sm:$0xf]
          %v405 = vld [vmem:[%s245 + $0x100] sm:$0xf]
          %v406 = vld [vmem:[%s245 + $0x11c] sm:$0xf]
          %v407 = vld [vmem:[%s245 + $0x138] sm:$0xf]
          %v408 = vld [vmem:[%s245 + $0x154] sm:$0xf]
          %v409 = vld [vmem:[%s245 + $0x170] sm:$0xf]
          %v410 = vld [vmem:[%s245 + $0x18c] sm:$0xf]
          %v411 = vld [vmem:[%s245 + $0x1a8] sm:$0xf]
          %v412 = vld [vmem:[%s255 + $0x1] sm:$0x1]
          %v414 = vperm.slane %v412, 0
          %v432 = vunpack.c.l.b16 %v396
          %v433 = vunpack.c.l.b16 %v397
          %v434 = vunpack.c.l.b16 %v398
          %v435 = vunpack.c.l.b16 %v399
          %v436 = vunpack.c.l.b16 %v400
          %v437 = vunpack.c.l.b16 %v401
          %v438 = vunpack.c.l.b16 %v402
          %v439 = vunpack.c.l.b16 %v403
          %v440 = vunpack.c.l.b16 %v404
          %v441 = vunpack.c.l.b16 %v405
          %v442 = vunpack.c.l.b16 %v406
          %v443 = vunpack.c.l.b16 %v407
          %v444 = vunpack.c.l.b16 %v408
          %v445 = vunpack.c.l.b16 %v409
          %v446 = vunpack.c.l.b16 %v410
          %v447 = vunpack.c.l.b16 %v411
          %v448 = vpack.c.b16 %v433, %v432
          %v449 = vpack.c.b16 %v435, %v434
          %v450 = vpack.c.b16 %v437, %v436
          %v451 = vpack.c.b16 %v439, %v438
          %v452 = vpack.c.b16 %v441, %v440
          %v453 = vpack.c.b16 %v443, %v442
          %v454 = vpack.c.b16 %v445, %v444
          %v455 = vpack.c.b16 %v447, %v446
          %464 = vmatpush.bf16.msra.mxu0 %v455
          %465 = vmatpush.bf16.msra.mxu0 %v454
          %466 = vmatpush.bf16.msra.mxu0 %v453
          %467 = vmatpush.bf16.msra.mxu0 %v452
          %468 = vmatpush.bf16.msra.mxu0 %v451
          %469 = vmatpush.bf16.msra.mxu0 %v450
          %470 = vmatpush.bf16.msra.mxu0 %v449
          %471 = vmatpush.bf16.msra.mxu0 %v448
          %472 = vmatmul.bf16.gmra.mxu0 %v332
          %v473 = vpop.f32.mrf.mxu0
          %v474 = vadd.f32 %v414, %v473
          %v475 = vpop.f32.mrf.mxu0
          %v476 = vadd.f32 %v414, %v475
          %477 = vdwg.mxu0
          %v478 = vld [vmem:[%s245 + $0x8] sm:$0xf]
          %v479 = vld [vmem:[%s245 + $0x24] sm:$0xf]
          %v480 = vld [vmem:[%s245 + $0x40] sm:$0xf]
          %v481 = vld [vmem:[%s245 + $0x5c] sm:$0xf]
          %v482 = vld [vmem:[%s245 + $0x78] sm:$0xf]
          %v483 = vld [vmem:[%s245 + $0x94] sm:$0xf]
          %v484 = vld [vmem:[%s245 + $0xb0] sm:$0xf]
          %v485 = vld [vmem:[%s245 + $0xcc] sm:$0xf]
          %v486 = vld [vmem:[%s245 + $0xe8] sm:$0xf]
          %v487 = vld [vmem:[%s245 + $0x104] sm:$0xf]
          %v488 = vld [vmem:[%s245 + $0x120] sm:$0xf]
          %v489 = vld [vmem:[%s245 + $0x13c] sm:$0xf]
          %v490 = vld [vmem:[%s245 + $0x158] sm:$0xf]
          %v491 = vld [vmem:[%s245 + $0x174] sm:$0xf]
          %v492 = vld [vmem:[%s245 + $0x190] sm:$0xf]
          %v493 = vld [vmem:[%s245 + $0x1ac] sm:$0xf]
          %v494 = vld [vmem:[%s255 + $0x2] sm:$0x1]
          %v496 = vperm.slane %v494, 0
          %v514 = vunpack.c.l.b16 %v478
          %v515 = vunpack.c.l.b16 %v479
          %v516 = vunpack.c.l.b16 %v480
          %v517 = vunpack.c.l.b16 %v481
          %v518 = vunpack.c.l.b16 %v482
          %v519 = vunpack.c.l.b16 %v483
          %v520 = vunpack.c.l.b16 %v484
          %v521 = vunpack.c.l.b16 %v485
          %v522 = vunpack.c.l.b16 %v486
          %v523 = vunpack.c.l.b16 %v487
          %v524 = vunpack.c.l.b16 %v488
          %v525 = vunpack.c.l.b16 %v489
          %v526 = vunpack.c.l.b16 %v490
          %v527 = vunpack.c.l.b16 %v491
          %v528 = vunpack.c.l.b16 %v492
          %v529 = vunpack.c.l.b16 %v493
          %v530 = vpack.c.b16 %v515, %v514
          %v531 = vpack.c.b16 %v517, %v516
          %v532 = vpack.c.b16 %v519, %v518
          %v533 = vpack.c.b16 %v521, %v520
          %v534 = vpack.c.b16 %v523, %v522
          %v535 = vpack.c.b16 %v525, %v524
          %v536 = vpack.c.b16 %v527, %v526
          %v537 = vpack.c.b16 %v529, %v528
          %546 = vmatpush.bf16.msra.mxu0 %v537
          %547 = vmatpush.bf16.msra.mxu0 %v536
          %548 = vmatpush.bf16.msra.mxu0 %v535
          %549 = vmatpush.bf16.msra.mxu0 %v534
          %550 = vmatpush.bf16.msra.mxu0 %v533
          %551 = vmatpush.bf16.msra.mxu0 %v532
          %552 = vmatpush.bf16.msra.mxu0 %v531
          %553 = vmatpush.bf16.msra.mxu0 %v530
          %554 = vmatmul.bf16.gmra.mxu0 %v332
          %v555 = vpop.f32.mrf.mxu0
          %v556 = vadd.f32 %v496, %v555
          %v557 = vpop.f32.mrf.mxu0
          %v558 = vadd.f32 %v496, %v557
          %559 = vdwg.mxu0
          %v560 = vld [vmem:[%s245 + $0xc] sm:$0xf]
          %v561 = vld [vmem:[%s245 + $0x28] sm:$0xf]
          %v562 = vld [vmem:[%s245 + $0x44] sm:$0xf]
          %v563 = vld [vmem:[%s245 + $0x60] sm:$0xf]
          %v564 = vld [vmem:[%s245 + $0x7c] sm:$0xf]
          %v565 = vld [vmem:[%s245 + $0x98] sm:$0xf]
          %v566 = vld [vmem:[%s245 + $0xb4] sm:$0xf]
          %v567 = vld [vmem:[%s245 + $0xd0] sm:$0xf]
          %v568 = vld [vmem:[%s245 + $0xec] sm:$0xf]
          %v569 = vld [vmem:[%s245 + $0x108] sm:$0xf]
          %v570 = vld [vmem:[%s245 + $0x124] sm:$0xf]
          %v571 = vld [vmem:[%s245 + $0x140] sm:$0xf]
          %v572 = vld [vmem:[%s245 + $0x15c] sm:$0xf]
          %v573 = vld [vmem:[%s245 + $0x178] sm:$0xf]
          %v574 = vld [vmem:[%s245 + $0x194] sm:$0xf]
          %v575 = vld [vmem:[%s245 + $0x1b0] sm:$0xf]
          %v576 = vld [vmem:[%s255 + $0x3] sm:$0x1]
          %v578 = vperm.slane %v576, 0
          %v596 = vunpack.c.l.b16 %v560
          %v597 = vunpack.c.l.b16 %v561
          %v598 = vunpack.c.l.b16 %v562
          %v599 = vunpack.c.l.b16 %v563
          %v600 = vunpack.c.l.b16 %v564
          %v601 = vunpack.c.l.b16 %v565
          %v602 = vunpack.c.l.b16 %v566
          %v603 = vunpack.c.l.b16 %v567
          %v604 = vunpack.c.l.b16 %v568
          %v605 = vunpack.c.l.b16 %v569
          %v606 = vunpack.c.l.b16 %v570
          %v607 = vunpack.c.l.b16 %v571
          %v608 = vunpack.c.l.b16 %v572
          %v609 = vunpack.c.l.b16 %v573
          %v610 = vunpack.c.l.b16 %v574
          %v611 = vunpack.c.l.b16 %v575
          %v612 = vpack.c.b16 %v597, %v596
          %v613 = vpack.c.b16 %v599, %v598
          %v614 = vpack.c.b16 %v601, %v600
          %v615 = vpack.c.b16 %v603, %v602
          %v616 = vpack.c.b16 %v605, %v604
          %v617 = vpack.c.b16 %v607, %v606
          %v618 = vpack.c.b16 %v609, %v608
          %v619 = vpack.c.b16 %v611, %v610
          %628 = vmatpush.bf16.msra.mxu0 %v619
          %629 = vmatpush.bf16.msra.mxu0 %v618
          %630 = vmatpush.bf16.msra.mxu0 %v617
          %631 = vmatpush.bf16.msra.mxu0 %v616
          %632 = vmatpush.bf16.msra.mxu0 %v615
          %633 = vmatpush.bf16.msra.mxu0 %v614
          %634 = vmatpush.bf16.msra.mxu0 %v613
          %635 = vmatpush.bf16.msra.mxu0 %v612
          %636 = vmatmul.bf16.gmra.mxu0 %v332
          %v637 = vpop.f32.mrf.mxu0
          %v638 = vadd.f32 %v578, %v637
          %v639 = vpop.f32.mrf.mxu0
          %v640 = vadd.f32 %v578, %v639
          %641 = vdwg.mxu0
          %v642 = vmax.f32 %v392, %v474
          %v643 = vmax.f32 %v394, %v476
          %v644 = vmax.f32 %v556, %v638
          %v645 = vmax.f32 %v558, %v640
          %v646 = vmax.f32 %v642, %v644
          %v647 = vmax.f32 %v643, %v645
          %v648 = vsub.f32 %v392, %v646
          %v649 = vsub.f32 %v394, %v647
          %v650 = vmul.f32 %v648, 1.442695
          %v651 = vpow.pop %v650
          %v652 = vmul.f32 %v649, 1.442695
          %v653 = vpow.pop %v652
          %v654 = vsub.f32 %v474, %v646
          %v655 = vsub.f32 %v476, %v647
          %v656 = vmul.f32 %v654, 1.442695
          %v657 = vpow.pop %v656
          %v658 = vmul.f32 %v655, 1.442695
          %v659 = vpow.pop %v658
          %v660 = vsub.f32 %v556, %v646
          %v661 = vsub.f32 %v558, %v647
          %v662 = vmul.f32 %v660, 1.442695
          %v663 = vpow.pop %v662
          %v664 = vmul.f32 %v661, 1.442695
          %v665 = vpow.pop %v664
          %v666 = vsub.f32 %v638, %v646
          %v667 = vsub.f32 %v640, %v647
          %v668 = vmul.f32 %v666, 1.442695
          %v669 = vpow.pop %v668
          %v670 = vmul.f32 %v667, 1.442695
          %v671 = vpow.pop %v670
          %v672 = vadd.f32 %v651, %v657
          %v673 = vadd.f32 %v653, %v659
          %v674 = vadd.f32 %v672, %v663
          %v675 = vadd.f32 %v673, %v665
          %v676 = vadd.f32 %v674, %v669
          %v677 = vadd.f32 %v675, %v671
          %v678 = vrcp.pop %v676
          %v679 = vrcp.pop %v677
          %v680 = vld [vmem:[%s245 + $0x10] sm:$0xf]
          %v681 = vld [vmem:[%s245 + $0x2c] sm:$0xf]
          %v682 = vld [vmem:[%s245 + $0x48] sm:$0xf]
          %v683 = vld [vmem:[%s245 + $0x64] sm:$0xf]
          %v684 = vld [vmem:[%s245 + $0x80] sm:$0xf]
          %v685 = vld [vmem:[%s245 + $0x9c] sm:$0xf]
          %v686 = vld [vmem:[%s245 + $0xb8] sm:$0xf]
          %v687 = vld [vmem:[%s245 + $0xd4] sm:$0xf]
          %v688 = vld [vmem:[%s245 + $0xf0] sm:$0xf]
          %v689 = vld [vmem:[%s245 + $0x10c] sm:$0xf]
          %v690 = vld [vmem:[%s245 + $0x128] sm:$0xf]
          %v691 = vld [vmem:[%s245 + $0x144] sm:$0xf]
          %v692 = vld [vmem:[%s245 + $0x160] sm:$0xf]
          %v693 = vld [vmem:[%s245 + $0x17c] sm:$0xf]
          %v694 = vld [vmem:[%s245 + $0x198] sm:$0xf]
          %v695 = vld [vmem:[%s245 + $0x1b4] sm:$0xf]
          %v696 = vld [vmem:[%s255 + $0x4] sm:$0x1]
          %v698 = vperm.slane %v696, 0
          %v716 = vunpack.c.l.b16 %v680
          %v717 = vunpack.c.l.b16 %v681
          %v718 = vunpack.c.l.b16 %v682
          %v719 = vunpack.c.l.b16 %v683
          %v720 = vunpack.c.l.b16 %v684
          %v721 = vunpack.c.l.b16 %v685
          %v722 = vunpack.c.l.b16 %v686
          %v723 = vunpack.c.l.b16 %v687
          %v724 = vunpack.c.l.b16 %v688
          %v725 = vunpack.c.l.b16 %v689
          %v726 = vunpack.c.l.b16 %v690
          %v727 = vunpack.c.l.b16 %v691
          %v728 = vunpack.c.l.b16 %v692
          %v729 = vunpack.c.l.b16 %v693
          %v730 = vunpack.c.l.b16 %v694
          %v731 = vunpack.c.l.b16 %v695
          %v732 = vpack.c.b16 %v717, %v716
          %v733 = vpack.c.b16 %v719, %v718
          %v734 = vpack.c.b16 %v721, %v720
          %v735 = vpack.c.b16 %v723, %v722
          %v736 = vpack.c.b16 %v725, %v724
          %v737 = vpack.c.b16 %v727, %v726
          %v738 = vpack.c.b16 %v729, %v728
          %v739 = vpack.c.b16 %v731, %v730
          %748 = vmatpush.bf16.msra.mxu0 %v739
          %749 = vmatpush.bf16.msra.mxu0 %v738
          %750 = vmatpush.bf16.msra.mxu0 %v737
          %751 = vmatpush.bf16.msra.mxu0 %v736
          %752 = vmatpush.bf16.msra.mxu0 %v735
          %753 = vmatpush.bf16.msra.mxu0 %v734
          %754 = vmatpush.bf16.msra.mxu0 %v733
          %755 = vmatpush.bf16.msra.mxu0 %v732
          %756 = vmatmul.bf16.gmra.mxu0 %v332
          %v757 = vpop.f32.mrf.mxu0
          %v758 = vadd.f32 %v698, %v757
          %v759 = vpop.f32.mrf.mxu0
          %v760 = vadd.f32 %v698, %v759
          %761 = vdwg.mxu0
          %v762 = vmul.f32 %v651, %v678
          %v763 = vmul.f32 %v653, %v679
          %v764 = vxor.u32 %v758, 2147483648
          %v765 = vxor.u32 %v760, 2147483648
          %v766 = vmul.f32 %v764, 1.442695
          %v767 = vpow.pop %v766
          %v768 = vmul.f32 %v765, 1.442695
          %v769 = vpow.pop %v768
          %v770 = vadd.f32 %v767, 1.0
          %v771 = vadd.f32 %v769, 1.0
          %v772 = vrcp.pop %v770
          %v773 = vmul.f32 %v770, %v772
          %v774 = vsub.f32 1.0, %v773
          %v775 = vmul.f32 %v772, %v774
          %v776 = vadd.f32 %v772, %v775
          %vm777 = vweird.f32 %v770
          %vm778 = vweird.f32 %v772
          %vm779 = vmor %vm777, %vm778
          %v780 = vsel %vm779, %v772, %v776
          %v781 = vand.u32 2147483647, %v770
          %vm782 = vcmp.eq.f32.partialorder %v781, 8.507059e+37
          %v783 = vand.u32 %v770, 2147483648
          %v784 = vor.u32 1.1754944e-38, %v783
          %v785 = vsel %vm782, %v784, %v780
          %v786 = vmul.f32 1.0, %v785
          %v787 = vrcp.pop %v771
          %v788 = vmul.f32 %v771, %v787
          %v789 = vsub.f32 1.0, %v788
          %v790 = vmul.f32 %v787, %v789
          %v791 = vadd.f32 %v787, %v790
          %vm792 = vweird.f32 %v771
          %vm793 = vweird.f32 %v787
          %vm794 = vmor %vm792, %vm793
          %v795 = vsel %vm794, %v787, %v791
          %v796 = vand.u32 2147483647, %v771
          %vm797 = vcmp.eq.f32.partialorder %v796, 8.507059e+37
          %v798 = vand.u32 %v771, 2147483648
          %v799 = vor.u32 1.1754944e-38, %v798
          %v800 = vsel %vm797, %v799, %v795
          %v801 = vmul.f32 1.0, %v800
          %v802 = vmul.f32 %v762, %v786
          %v803 = vmul.f32 %v763, %v801
          %v804 = vadd.f32 %v802, 0.0
          %v805 = vadd.f32 %v803, 0.0
          %v806 = vld [vmem:[%s245 + $0x14] sm:$0xf]
          %v807 = vld [vmem:[%s245 + $0x30] sm:$0xf]
          %v808 = vld [vmem:[%s245 + $0x4c] sm:$0xf]
          %v809 = vld [vmem:[%s245 + $0x68] sm:$0xf]
          %v810 = vld [vmem:[%s245 + $0x84] sm:$0xf]
          %v811 = vld [vmem:[%s245 + $0xa0] sm:$0xf]
          %v812 = vld [vmem:[%s245 + $0xbc] sm:$0xf]
          %v813 = vld [vmem:[%s245 + $0xd8] sm:$0xf]
          %v814 = vld [vmem:[%s245 + $0xf4] sm:$0xf]
          %v815 = vld [vmem:[%s245 + $0x110] sm:$0xf]
          %v816 = vld [vmem:[%s245 + $0x12c] sm:$0xf]
          %v817 = vld [vmem:[%s245 + $0x148] sm:$0xf]
          %v818 = vld [vmem:[%s245 + $0x164] sm:$0xf]
          %v819 = vld [vmem:[%s245 + $0x180] sm:$0xf]
          %v820 = vld [vmem:[%s245 + $0x19c] sm:$0xf]
          %v821 = vld [vmem:[%s245 + $0x1b8] sm:$0xf]
          %v822 = vld [vmem:[%s255 + $0x5] sm:$0x1]
          %v824 = vperm.slane %v822, 0
          %v842 = vunpack.c.l.b16 %v806
          %v843 = vunpack.c.l.b16 %v807
          %v844 = vunpack.c.l.b16 %v808
          %v845 = vunpack.c.l.b16 %v809
          %v846 = vunpack.c.l.b16 %v810
          %v847 = vunpack.c.l.b16 %v811
          %v848 = vunpack.c.l.b16 %v812
          %v849 = vunpack.c.l.b16 %v813
          %v850 = vunpack.c.l.b16 %v814
          %v851 = vunpack.c.l.b16 %v815
          %v852 = vunpack.c.l.b16 %v816
          %v853 = vunpack.c.l.b16 %v817
          %v854 = vunpack.c.l.b16 %v818
          %v855 = vunpack.c.l.b16 %v819
          %v856 = vunpack.c.l.b16 %v820
          %v857 = vunpack.c.l.b16 %v821
          %v858 = vpack.c.b16 %v843, %v842
          %v859 = vpack.c.b16 %v845, %v844
          %v860 = vpack.c.b16 %v847, %v846
          %v861 = vpack.c.b16 %v849, %v848
          %v862 = vpack.c.b16 %v851, %v850
          %v863 = vpack.c.b16 %v853, %v852
          %v864 = vpack.c.b16 %v855, %v854
          %v865 = vpack.c.b16 %v857, %v856
          %874 = vmatpush.bf16.msra.mxu0 %v865
          %875 = vmatpush.bf16.msra.mxu0 %v864
          %876 = vmatpush.bf16.msra.mxu0 %v863
          %877 = vmatpush.bf16.msra.mxu0 %v862
          %878 = vmatpush.bf16.msra.mxu0 %v861
          %879 = vmatpush.bf16.msra.mxu0 %v860
          %880 = vmatpush.bf16.msra.mxu0 %v859
          %881 = vmatpush.bf16.msra.mxu0 %v858
          %882 = vmatmul.bf16.gmra.mxu0 %v332
          %v883 = vpop.f32.mrf.mxu0
          %v884 = vadd.f32 %v824, %v883
          %v885 = vpop.f32.mrf.mxu0
          %v886 = vadd.f32 %v824, %v885
          %887 = vdwg.mxu0
          %v888 = vmul.f32 %v657, %v678
          %v889 = vmul.f32 %v659, %v679
          %v890 = vxor.u32 %v884, 2147483648
          %v891 = vxor.u32 %v886, 2147483648
          %v892 = vmul.f32 %v890, 1.442695
          %v893 = vpow.pop %v892
          %v894 = vmul.f32 %v891, 1.442695
          %v895 = vpow.pop %v894
          %v896 = vadd.f32 %v893, 1.0
          %v897 = vadd.f32 %v895, 1.0
          %v898 = vrcp.pop %v896
          %v899 = vmul.f32 %v896, %v898
          %v900 = vsub.f32 1.0, %v899
          %v901 = vmul.f32 %v898, %v900
          %v902 = vadd.f32 %v898, %v901
          %vm903 = vweird.f32 %v896
          %vm904 = vweird.f32 %v898
          %vm905 = vmor %vm903, %vm904
          %v906 = vsel %vm905, %v898, %v902
          %v907 = vand.u32 2147483647, %v896
          %vm908 = vcmp.eq.f32.partialorder %v907, 8.507059e+37
          %v909 = vand.u32 %v896, 2147483648
          %v910 = vor.u32 1.1754944e-38, %v909
          %v911 = vsel %vm908, %v910, %v906
          %v912 = vmul.f32 1.0, %v911
          %v913 = vrcp.pop %v897
          %v914 = vmul.f32 %v897, %v913
          %v915 = vsub.f32 1.0, %v914
          %v916 = vmul.f32 %v913, %v915
          %v917 = vadd.f32 %v913, %v916
          %vm918 = vweird.f32 %v897
          %vm919 = vweird.f32 %v913
          %vm920 = vmor %vm918, %vm919
          %v921 = vsel %vm920, %v913, %v917
          %v922 = vand.u32 2147483647, %v897
          %vm923 = vcmp.eq.f32.partialorder %v922, 8.507059e+37
          %v924 = vand.u32 %v897, 2147483648
          %v925 = vor.u32 1.1754944e-38, %v924
          %v926 = vsel %vm923, %v925, %v921
          %v927 = vmul.f32 1.0, %v926
          %v928 = vmul.f32 %v888, %v912
          %v929 = vmul.f32 %v889, %v927
          %v930 = vadd.f32 %v804, %v928
          %v931 = vadd.f32 %v805, %v929
          %v932 = vld [vmem:[%s245 + $0x18] sm:$0xf]
          %v933 = vld [vmem:[%s245 + $0x34] sm:$0xf]
          %v934 = vld [vmem:[%s245 + $0x50] sm:$0xf]
          %v935 = vld [vmem:[%s245 + $0x6c] sm:$0xf]
          %v936 = vld [vmem:[%s245 + $0x88] sm:$0xf]
          %v937 = vld [vmem:[%s245 + $0xa4] sm:$0xf]
          %v938 = vld [vmem:[%s245 + $0xc0] sm:$0xf]
          %v939 = vld [vmem:[%s245 + $0xdc] sm:$0xf]
          %v940 = vld [vmem:[%s245 + $0xf8] sm:$0xf]
          %v941 = vld [vmem:[%s245 + $0x114] sm:$0xf]
          %v942 = vld [vmem:[%s245 + $0x130] sm:$0xf]
          %v943 = vld [vmem:[%s245 + $0x14c] sm:$0xf]
          %v944 = vld [vmem:[%s245 + $0x168] sm:$0xf]
          %v945 = vld [vmem:[%s245 + $0x184] sm:$0xf]
          %v946 = vld [vmem:[%s245 + $0x1a0] sm:$0xf]
          %v947 = vld [vmem:[%s245 + $0x1bc] sm:$0xf]
          %v948 = vld [vmem:[%s255 + $0x6] sm:$0x1]
          %v950 = vperm.slane %v948, 0
          %v968 = vunpack.c.l.b16 %v932
          %v969 = vunpack.c.l.b16 %v933
          %v970 = vunpack.c.l.b16 %v934
          %v971 = vunpack.c.l.b16 %v935
          %v972 = vunpack.c.l.b16 %v936
          %v973 = vunpack.c.l.b16 %v937
          %v974 = vunpack.c.l.b16 %v938
          %v975 = vunpack.c.l.b16 %v939
          %v976 = vunpack.c.l.b16 %v940
          %v977 = vunpack.c.l.b16 %v941
          %v978 = vunpack.c.l.b16 %v942
          %v979 = vunpack.c.l.b16 %v943
          %v980 = vunpack.c.l.b16 %v944
          %v981 = vunpack.c.l.b16 %v945
          %v982 = vunpack.c.l.b16 %v946
          %v983 = vunpack.c.l.b16 %v947
          %v984 = vpack.c.b16 %v969, %v968
          %v985 = vpack.c.b16 %v971, %v970
          %v986 = vpack.c.b16 %v973, %v972
          %v987 = vpack.c.b16 %v975, %v974
          %v988 = vpack.c.b16 %v977, %v976
          %v989 = vpack.c.b16 %v979, %v978
          %v990 = vpack.c.b16 %v981, %v980
          %v991 = vpack.c.b16 %v983, %v982
          %1000 = vmatpush.bf16.msra.mxu0 %v991
          %1001 = vmatpush.bf16.msra.mxu0 %v990
          %1002 = vmatpush.bf16.msra.mxu0 %v989
          %1003 = vmatpush.bf16.msra.mxu0 %v988
          %1004 = vmatpush.bf16.msra.mxu0 %v987
          %1005 = vmatpush.bf16.msra.mxu0 %v986
          %1006 = vmatpush.bf16.msra.mxu0 %v985
          %1007 = vmatpush.bf16.msra.mxu0 %v984
          %1008 = vmatmul.bf16.gmra.mxu0 %v332
          %v1009 = vpop.f32.mrf.mxu0
          %v1010 = vadd.f32 %v950, %v1009
          %v1011 = vpop.f32.mrf.mxu0
          %v1012 = vadd.f32 %v950, %v1011
          %1013 = vdwg.mxu0
          %v1014 = vmul.f32 %v663, %v678
          %v1015 = vmul.f32 %v665, %v679
          %v1016 = vxor.u32 %v1010, 2147483648
          %v1017 = vxor.u32 %v1012, 2147483648
          %v1018 = vmul.f32 %v1016, 1.442695
          %v1019 = vpow.pop %v1018
          %v1020 = vmul.f32 %v1017, 1.442695
          %v1021 = vpow.pop %v1020
          %v1022 = vadd.f32 %v1019, 1.0
          %v1023 = vadd.f32 %v1021, 1.0
          %v1024 = vrcp.pop %v1022
          %v1025 = vmul.f32 %v1022, %v1024
          %v1026 = vsub.f32 1.0, %v1025
          %v1027 = vmul.f32 %v1024, %v1026
          %v1028 = vadd.f32 %v1024, %v1027
          %vm1029 = vweird.f32 %v1022
          %vm1030 = vweird.f32 %v1024
          %vm1031 = vmor %vm1029, %vm1030
          %v1032 = vsel %vm1031, %v1024, %v1028
          %v1033 = vand.u32 2147483647, %v1022
          %vm1034 = vcmp.eq.f32.partialorder %v1033, 8.507059e+37
          %v1035 = vand.u32 %v1022, 2147483648
          %v1036 = vor.u32 1.1754944e-38, %v1035
          %v1037 = vsel %vm1034, %v1036, %v1032
          %v1038 = vmul.f32 1.0, %v1037
          %v1039 = vrcp.pop %v1023
          %v1040 = vmul.f32 %v1023, %v1039
          %v1041 = vsub.f32 1.0, %v1040
          %v1042 = vmul.f32 %v1039, %v1041
          %v1043 = vadd.f32 %v1039, %v1042
          %vm1044 = vweird.f32 %v1023
          %vm1045 = vweird.f32 %v1039
          %vm1046 = vmor %vm1044, %vm1045
          %v1047 = vsel %vm1046, %v1039, %v1043
          %v1048 = vand.u32 2147483647, %v1023
          %vm1049 = vcmp.eq.f32.partialorder %v1048, 8.507059e+37
          %v1050 = vand.u32 %v1023, 2147483648
          %v1051 = vor.u32 1.1754944e-38, %v1050
          %v1052 = vsel %vm1049, %v1051, %v1047
          %v1053 = vmul.f32 1.0, %v1052
          %v1054 = vmul.f32 %v1014, %v1038
          %v1055 = vmul.f32 %v1015, %v1053
          %v1056 = vadd.f32 %v930, %v1054
          %v1057 = vadd.f32 %v931, %v1055
          %v1058 = vmul.f32 %v1056, 1.442695
          %v1059 = vpow.pop %v1058
          %v1060 = vmul.f32 %v1057, 1.442695
          %v1061 = vpow.pop %v1060
          %s1062 = smul.u32 %s26, 128
          %v1063 = vlaneseq
          %v1064 = vand.u32 %v1063, 127
          %v1065 = vstv %s1062
          %v1066 = vadd.s32 %v1065, %v1064
          %vm1067 = vcmp.lt.s32.totalorder %v1066, 32
          %v1068 = vsel %vm1067, %v1059, 0.0
          %v1069 = vsel %vm1067, %v1061, 0.0
          %s1070 = smul.u32 %s26, 16
          %s1071 = scalar_lea.vmem [#allocation2], %s1070
          %1072 = vst [vmem:[%s1071] sm:$0xff] %v1068
          %1073 = vst [vmem:[%s1071 + $0x8] sm:$0xff] %v1069
          %v1074 = vld [vmem:[#allocation3] sm:$0xff]
          %v1075 = vld [vmem:[#allocation3 + $0x8] sm:$0xff]
          %1076 = vadd.xlane.f32.xlu0 %v1068
          %v1077 = vpop.xlane.xlu0 %1076
          %1078 = vadd.xlane.f32.xlu0 %v1069
          %v1079 = vpop.xlane.xlu0 %1078
          %v1080 = vadd.f32 %v1074, %v1077
          %v1081 = vadd.f32 %v1075, %v1079
          %vm1082 = vcmask 7168
          %1083 = vst.msk [vmem:[#allocation3] sm:$0xff] %vm1082, %v1080
          %1084 = vst.msk [vmem:[#allocation3 + $0x8] sm:$0xff] %vm1082, %v1081
        $region52: #{tpu_custom_call.1} parent=31 // pred_fallthru
          _
        %p1085 = scmp.ge.s32.totalorder %s26, 1
        // Predicated region
        $region53: #{tpu_custom_call.1} parent=31 // pred_check
          %p1086 = pneg %p1085
        $region54: #{tpu_custom_call.1} parent=31 // pred_check_branch
          %1088 = sbr.rel (%p1086) target = $region56
        $region55: #{tpu_custom_call.1} parent=31 // pred_region
          %s1089 = ssub.s32 %s26, 1
          %s1090 = smul.u32 %s1089, 16
          %s1091 = scalar_lea.vmem [#allocation2], %s1090
          %v1092 = vld [vmem:[%s1091] sm:$0xff]
          %v1093 = vld [vmem:[%s1091 + $0x8] sm:$0xff]
          %v1094 = vld [vmem:[#allocation3] sm:$0xff]
          %v1095 = vld [vmem:[#allocation3 + $0x8] sm:$0xff]
          %v1096 = vrcp.pop %v1094
          %v1097 = vmul.f32 %v1094, %v1096
          %v1098 = vsub.f32 1.0, %v1097
          %v1099 = vmul.f32 %v1096, %v1098
          %v1100 = vadd.f32 %v1096, %v1099
          %vm1101 = vweird.f32 %v1094
          %vm1102 = vweird.f32 %v1096
          %vm1103 = vmor %vm1101, %vm1102
          %v1104 = vsel %vm1103, %v1096, %v1100
          %v1105 = vand.u32 2147483647, %v1094
          %vm1106 = vcmp.eq.f32.partialorder %v1105, 8.507059e+37
          %v1107 = vand.u32 %v1094, 2147483648
          %v1108 = vor.u32 1.1754944e-38, %v1107
          %v1109 = vsel %vm1106, %v1108, %v1104
          %v1110 = vmul.f32 1.0, %v1109
          %v1111 = vrcp.pop %v1095
          %v1112 = vmul.f32 %v1095, %v1111
          %v1113 = vsub.f32 1.0, %v1112
          %v1114 = vmul.f32 %v1111, %v1113
          %v1115 = vadd.f32 %v1111, %v1114
          %vm1116 = vweird.f32 %v1095
          %vm1117 = vweird.f32 %v1111
          %vm1118 = vmor %vm1116, %vm1117
          %v1119 = vsel %vm1118, %v1111, %v1115
          %v1120 = vand.u32 2147483647, %v1095
          %vm1121 = vcmp.eq.f32.partialorder %v1120, 8.507059e+37
          %v1122 = vand.u32 %v1095, 2147483648
          %v1123 = vor.u32 1.1754944e-38, %v1122
          %v1124 = vsel %vm1121, %v1123, %v1119
          %v1125 = vmul.f32 1.0, %v1124
          %1127 = vset.pattern.permute.xlu0 0
          %1128 = vperm.xlu0 %1127, %v1110
          %v1129 = vpop.permute.xlu0 %1128
          %1132 = vset.pattern.permute.xlu0 0
          %1133 = vperm.xlu0 %1132, %v1125
          %v1134 = vpop.permute.xlu0 %1133
          %v1136 = vmul.f32 %v1092, %v1129
          %v1137 = vmul.f32 %v1093, %v1134
          %1138 = vst [vmem:[%s283] sm:$0xff] %v1136
          %1139 = vst [vmem:[%s283 + $0x8] sm:$0xff] %v1137
        $region56: #{tpu_custom_call.1} parent=31 // pred_fallthru
          _
        %s1140 = sand.u32 %s135, 1
        %s1141 = scalar_lea.sflag [#allocation6], %s1140
        %s1142 = sand.u32 %s135, 1
        %s1143 = smul.addr %s1142, 16
        %s1144 = scalar_lea.vmem [#allocation10], %s1143
        // Predicated region
        $region57: #{tpu_custom_call.1} parent=31 // pred_check
          %p1145 = pneg %p145
        $region58: #{tpu_custom_call.1} parent=31 // pred_check_branch
          %1147 = sbr.rel (%p1145) target = $region60
        $region59: #{tpu_custom_call.1} parent=31 // pred_region
          %s1148 = ssub.s32 %s26, 1
          %p1149 = scmp.gt.s32.totalorder %s1148, 0
          %s1150 = scalar_select %p1149, %s1148, 0
          %s1151 = smul.u32 2, %s25
          %1153 = vsyncadd %s1141, 0
          %s1154 = sadd.s32 %s1150, %s1151
          %s1155 = smul.addr %s1154, 8
          %s1156 = scalar_lea.hbm %s3, %s1155
          %s1157 = sshll.u32 %s1144, 4
          %s1158 = int_to_ptr.vmem [resolvable:$true] %s1157
          %s1159 = sshll.u32 %s1156, 4
          %s1160 = int_to_ptr.hbm [resolvable:$true] %s1159
          %1165 = dma.vmem_to_hbm [thread:$0]  %s1158, 256, %s1160, %s1141, 128, 128, 8
        $region60: #{tpu_custom_call.1} parent=31 // pred_fallthru
          _
      $region32: #{tpu_custom_call.1} parent=5 // pred_fallthru
        _
      %p1166 = scmp.le.s32.totalorder 2, %s16
      // Predicated region
      $region61: #{tpu_custom_call.1} parent=5 // pred_check
        %p1167 = pneg %p1166
      $region62: #{tpu_custom_call.1} parent=5 // pred_check_branch
        %1169 = sbr.rel (%p1167) target = $region64
      $region63: #{tpu_custom_call.1} parent=5 // pred_region
        %s1170 = ssub.s32 %s16, 2
        // Predicated region
        $region65: #{tpu_custom_call.1} parent=63 // pred_check
          %p1171 = pneg %p151
        $region66: #{tpu_custom_call.1} parent=63 // pred_check_branch
          %1173 = sbr.rel (%p1171) target = $region68
        $region67: #{tpu_custom_call.1} parent=63 // pred_region
          %s1174 = sand.u32 %s136, 1
          %s1175 = scalar_lea.sflag [#allocation6], %s1174
          %s1176 = sand.u32 %s136, 1
          %s1177 = smul.addr %s1176, 16
          %s1178 = scalar_lea.vmem [#allocation10], %s1177
          %1180 = dma.done %s1175, 256
        $region68: #{tpu_custom_call.1} parent=63 // pred_fallthru
          _
      $region64: #{tpu_custom_call.1} parent=5 // pred_fallthru
        _
    $region6: #{tpu_custom_call.1} parent=1 // loop_footer
      %s20 = sadd.s32 1, %s16
    $region7: #{tpu_custom_call.1} parent=1 // loop_footer_branch
      %15 = sbr.rel target = $region3
    $region8: #{tpu_custom_call.1} parent=1 // loop_exit
      _
    %1181 = vsyncpa [#allocation5], 1
    %s1182 = scalar_lea.sflag [#allocation5], 1
    %1183 = vsyncpa %s1182, 1
    %1184 = vsyncpa [#allocation8], 1
    %s1185 = scalar_lea.sflag [#allocation8], 1
    %1186 = vsyncpa %s1185, 1
    %1187 = vsyncpa [#allocation6], 1
    %s1188 = scalar_lea.sflag [#allocation6], 1
    %1189 = vsyncpa %s1188, 1

</llo_original>
